<compile_context>
chip_gen: v6e
topology: v6e:2x2x1
jax: 0.10.0
libtpu: 0.0.40
codegen_flags: <defaults>
</compile_context>

<pallas_src>
import jax
import jax.numpy as jnp
from jax import lax
from jax.experimental import pallas as pl
from jax.experimental.pallas import tpu as pltpu


def _crossen_kernel(sim_ref, w_ref, out_ref):
    i = pl.program_id(0)
    tm = sim_ref.shape[0]

    sim = sim_ref[...].astype(jnp.float32)                       # (TM, N)

    # Row-wise logsumexp (log-softmax denominator), numerically stable.
    row_max = jnp.max(sim, axis=-1, keepdims=True)               # (TM, 1)  XLU
    shifted = sim - row_max                                      # (TM, N)  VPU
    sum_exp = jnp.sum(jnp.exp(shifted), axis=-1, keepdims=True)  # EUP + XLU
    log_den = jnp.log(sum_exp)                                   # (TM, 1)

    # Only the diagonal of log_softmax is needed:
    #   diag_logpt[r] = (sim[r, i*TM + r] - row_max[r]) - log(sum_exp[r])
    # One (TM, N) compare + masked row reduction; no log-softmax matrix.
    rows = lax.broadcasted_iota(jnp.int32, sim.shape, 0)
    cols = lax.broadcasted_iota(jnp.int32, sim.shape, 1)
    diag_mask = cols == rows + i * tm
    diag_shift = jnp.sum(jnp.where(diag_mask, shifted, 0.0),
                         axis=-1, keepdims=True)                 # (TM, 1)
    diag_logpt = diag_shift - log_den                            # (TM, 1)

    w = w_ref[...].astype(jnp.float32)                           # (TM, 1)
    # Per-row weighted negative log-prob; padded rows (w == 0) contribute 0.
    out_ref[...] = -diag_logpt * w                               # (TM, 1)


# Per-input-buffer VMEM budget (double-buffered by the pipeline) and the
# explicit scoped-VMEM limit handed to Mosaic. 2 * 8 MiB sim buffers + tiny
# weight/output buffers stays well under 32 MiB on v5e / v6e / v7x.
_SIM_BUF_BUDGET = 8 * 1024 * 1024
_VMEM_LIMIT = 32 * 1024 * 1024


def _pick_tm(n: int, itemsize: int) -> int:
    """Largest row tile TM such that a double-buffered (TM, N) sim tile stays
    comfortably under the scoped-VMEM limit on every TPU generation."""
    max_rows = max(8, _SIM_BUF_BUDGET // max(1, n * itemsize))
    if n <= max_rows:
        return n                             # whole matrix is one block
    for cand in (2048, 1024, 512, 256, 128):
        if cand <= max_rows and n % cand == 0:
            return cand
    # Ragged / awkward N: use a large sublane-aligned tile and zero-pad rows.
    return max(8, min(1024, (max_rows // 8) * 8))


def cross_en(sim_matrix: jax.Array, weight: jax.Array, *, tm: int | None = None) -> jax.Array:
    """CrossEn forward. sim_matrix: (N, N); weight: (N,). Returns scalar f32."""
    n = sim_matrix.shape[0]
    assert sim_matrix.shape == (n, n), "sim_matrix must be square"
    assert weight.shape == (n,), "weight must be (N,)"

    itemsize = jnp.dtype(sim_matrix.dtype).itemsize
    if tm is None:
        tm = _pick_tm(n, itemsize)
    tm = int(min(tm, n))
    if tm < n:
        tm = max(8, (tm // 8) * 8)           # sublane alignment when tiled

    n_pad = ((n + tm - 1) // tm) * tm        # pad rows only; columns stay full
    num_blocks = n_pad // tm

    sim = sim_matrix
    w = weight
    if n_pad != n:
        # Padded rows: all-zero sim row (finite lse) and zero weight -> zero loss.
        sim = jnp.pad(sim, ((0, n_pad - n), (0, 0)))
        w = jnp.pad(w, (0, n_pad - n))
    w_col = w.reshape(n_pad, 1)

    cost = pl.CostEstimate(
        flops=5 * n * n,
        transcendentals=n * n + n,           # exp per element + log per row
        bytes_accessed=n * n * itemsize + 8 * n,
    )

    nce = pl.pallas_call(
        _crossen_kernel,
        out_shape=jax.ShapeDtypeStruct((n_pad, 1), jnp.float32),
        grid_spec=pltpu.PrefetchScalarGridSpec(
            num_scalar_prefetch=0,
            grid=(num_blocks,),
            in_specs=[
                pl.BlockSpec((tm, n), lambda i: (i, 0)),   # row block of sim
                pl.BlockSpec((tm, 1), lambda i: (i, 0)),   # matching weights
            ],
            out_specs=pl.BlockSpec((tm, 1), lambda i: (i, 0)),
        ),
        compiler_params=pltpu.CompilerParams(
            dimension_semantics=("parallel",),             # shardable across TCs
            vmem_limit_bytes=_VMEM_LIMIT,
        ),
        cost_estimate=cost,
    )(sim, w_col)

    # Tiny wrapper-side reduction: mean over the original N rows
    # (padded rows are exactly zero, so summing the padded vector is safe).
    return jnp.sum(nce) / jnp.float32(n)


def _cross_en_ref(sim_matrix, weight):
    logpt = jax.nn.log_softmax(sim_matrix.astype(jnp.float32), axis=-1)
    diag = jnp.diagonal(logpt)
    return jnp.mean(-diag * weight.astype(jnp.float32))


if __name__ == "__main__":
    key = jax.random.PRNGKey(0)
    k1, k2 = jax.random.split(key)

    # Small paired (text, video) similarity batch.
    N = 8
    sim_matrix = jax.random.normal(k1, (N, N), dtype=jnp.float32)
    weight = jax.random.uniform(k2, (N,), dtype=jnp.float32)

    loss = cross_en(sim_matrix, weight)
    jax.block_until_ready(loss)
    ref = _cross_en_ref(sim_matrix, weight)
    assert jnp.allclose(loss, ref, atol=1e-5, rtol=1e-5), (loss, ref)

    # Also exercise the multi-block (pipelined, parallel-grid) path.
    k3, k4 = jax.random.split(k2)
    N2 = 64
    sim2 = jax.random.normal(k3, (N2, N2), dtype=jnp.float32)
    w2 = jax.random.uniform(k4, (N2,), dtype=jnp.float32)
    loss2 = cross_en(sim2, w2, tm=16)
    jax.block_until_ready(loss2)
    ref2 = _cross_en_ref(sim2, w2)
    assert jnp.allclose(loss2, ref2, atol=1e-5, rtol=1e-5), (loss2, ref2)

    # Exercise a ragged (row-padded) shape too.
    k5, k6 = jax.random.split(k4)
    N3 = 40
    sim3 = jax.random.normal(k5, (N3, N3), dtype=jnp.float32)
    w3 = jax.random.uniform(k6, (N3,), dtype=jnp.float32)
    loss3 = cross_en(sim3, w3, tm=16)
    jax.block_until_ready(loss3)
    ref3 = _cross_en_ref(sim3, w3)
    assert jnp.allclose(loss3, ref3, atol=1e-5, rtol=1e-5), (loss3, ref3)

    print("KERNEL_OK")
</pallas_src>

<mosaic_0001>
module attributes {stable_mosaic.version = 11 : i64} {
  func.func @_crossen_kernel(%arg0: i32, %arg1: memref<8x8xf32, #tpu.memory_space<vmem>>, %arg2: memref<8x1xf32, #tpu.memory_space<vmem>>, %arg3: memref<8x1xf32, #tpu.memory_space<vmem>>) attributes {dimension_semantics = [#tpu.dimension_semantics<parallel>], iteration_bounds = array<i64: 1>, scalar_prefetch = 0 : i64, scratch_operands = 0 : i64, tpu.core_type = #tpu.core_type<tc>, window_params = [{transform_indices = @transform_0, window_bounds = array<i64: 8, 8>}, {transform_indices = @transform_1, window_bounds = array<i64: 8, 1>}, {transform_indices = @transform_2, window_bounds = array<i64: 8, 1>}]} {
    %c0 = arith.constant 0 : index
    %c0_0 = arith.constant 0 : index
    %0 = vector.load %arg1[%c0, %c0_0] : memref<8x8xf32, #tpu.memory_space<vmem>>, vector<8x8xf32>
    %cst = arith.constant dense<0xFF800000> : vector<8xf32>
    %1 = vector.multi_reduction <maximumf>, %0, %cst [1] : vector<8x8xf32> to vector<8xf32>
    %2 = vector.shape_cast %1 : vector<8xf32> to vector<8x1xf32>
    %3 = vector.broadcast %2 : vector<8x1xf32> to vector<8x8xf32>
    %4 = arith.subf %0, %3 : vector<8x8xf32>
    %5 = math.exp %4 : vector<8x8xf32>
    %cst_1 = arith.constant dense<0.000000e+00> : vector<8xf32>
    %6 = vector.multi_reduction <add>, %5, %cst_1 [1] : vector<8x8xf32> to vector<8xf32>
    %7 = vector.shape_cast %6 : vector<8xf32> to vector<8x1xf32>
    %8 = math.log %7 : vector<8x1xf32>
    %9 = tpu.iota {dimensions = array<i32: 0>} : vector<8x8xi32>
    %10 = tpu.iota {dimensions = array<i32: 1>} : vector<8x8xi32>
    %c8_i32 = arith.constant 8 : i32
    %11 = arith.muli %arg0, %c8_i32 : i32
    %12 = vector.broadcast %11 : i32 to vector<8x8xi32>
    %13 = arith.addi %9, %12 : vector<8x8xi32>
    %14 = arith.cmpi eq, %10, %13 : vector<8x8xi32>
    %cst_2 = arith.constant 0.000000e+00 : f32
    %15 = vector.broadcast %cst_2 : f32 to vector<8x8xf32>
    %16 = arith.select %14, %4, %15 : vector<8x8xi1>, vector<8x8xf32>
    %cst_3 = arith.constant dense<0.000000e+00> : vector<8xf32>
    %17 = vector.multi_reduction <add>, %16, %cst_3 [1] : vector<8x8xf32> to vector<8xf32>
    %18 = vector.shape_cast %17 : vector<8xf32> to vector<8x1xf32>
    %19 = arith.subf %18, %8 : vector<8x1xf32>
    %c0_4 = arith.constant 0 : index
    %c0_5 = arith.constant 0 : index
    %20 = vector.load %arg2[%c0_4, %c0_5] : memref<8x1xf32, #tpu.memory_space<vmem>>, vector<8x1xf32>
    %cst_6 = arith.constant 0.000000e+00 : f32
    %21 = vector.broadcast %cst_6 : f32 to vector<8x1xf32>
    %22 = arith.subf %21, %19 : vector<8x1xf32>
    %23 = arith.mulf %22, %20 : vector<8x1xf32>
    %c0_7 = arith.constant 0 : index
    %c0_8 = arith.constant 0 : index
    %24 = vector.load %arg3[%c0_7, %c0_8] : memref<8x1xf32, #tpu.memory_space<vmem>>, vector<8x1xf32>
    tpu.vector_store %arg3[%c0_7, %c0_8], %23 {strides = array<i32>} : memref<8x1xf32, #tpu.memory_space<vmem>>, vector<8x1xf32>,
    return
  }
  func.func @transform_0(%arg0: i32) -> (i32, i32) {
    %c0_i32 = arith.constant 0 : i32
    %c0_i32_0 = arith.constant 0 : i32
    return %arg0, %c0_i32 : i32, i32
  }
  func.func @transform_1(%arg0: i32) -> (i32, i32) {
    %c0_i32 = arith.constant 0 : i32
    %c0_i32_0 = arith.constant 0 : i32
    return %arg0, %c0_i32 : i32, i32
  }
  func.func @transform_2(%arg0: i32) -> (i32, i32) {
    %c0_i32 = arith.constant 0 : i32
    %c0_i32_0 = arith.constant 0 : i32
    return %arg0, %c0_i32 : i32, i32
  }
}

</mosaic_0001>

<llo_original>
// kernel: tpu_custom_call.1
$region0: #{tpu_custom_call.1}
  #allocation0 [shape = 'u32[]', space=smem, size = 0x4, offset = 0x4, fixed_abs, tag = 'smem constant byte address 0x4 - core index']
  #allocation1 [shape = 'u32[144,128]{1,0:T(1,128)}', space=vmem, size = 0x12000, scoped, tag = 'internal scratch']
  %s0 = inlined_call_operand.vmem [shape: f32[8,8], index: 0, kind: input, shape index: {}]
  %s1 = inlined_call_operand.vmem [shape: f32[8,1], index: 1, kind: input, shape index: {}]
  %s2 = inlined_call_operand.vmem [shape: f32[8,1], index: 2, kind: output, shape index: {}]
  %s3 = sld [smem:[#allocation0]]
  $region18: #{tpu_custom_call.1} parent=0
    _
  %s5 = ssub.s32 1, %s3
  %s6 = scalar_select 0, %s5, %s3
  // Predicated region
  $region2: #{tpu_custom_call.1} parent=0 // pred_check
    _
  $region3: #{tpu_custom_call.1} parent=0 // pred_check_branch
    %8 = sbr.rel (0) target = $region5
  $region4: #{tpu_custom_call.1} parent=0 // pred_region
    _
  $region5: #{tpu_custom_call.1} parent=0 // pred_fallthru
    _
  // Predicated region
  $region6: #{tpu_custom_call.1} parent=0 // pred_check
    _
  $region7: #{tpu_custom_call.1} parent=0 // pred_check_branch
    %10 = sbr.rel (0) target = $region9
  $region8: #{tpu_custom_call.1} parent=0 // pred_region
    _
  $region9: #{tpu_custom_call.1} parent=0 // pred_fallthru
    _
  %v11 = vld [vmem:[%s0] sm:$0xff]
  %vm12 = vcmask 64512
  %v13 = vsel %vm12, %v11, -inf
  %14 = vmax.xlane.f32.xlu0 %v13
  %v15 = vpop.xlane.xlu0 %14
  %v16 = vsub.f32 %v11, %v15
  %v17 = vmul.f32 %v16, 1.442695
  %v18 = vpow.pop %v17
  %v19 = vsel %vm12, %v18, 0.0
  %20 = vadd.xlane.f32.xlu0 %v19
  %v21 = vpop.xlane.xlu0 %20
  %v22 = vlog2.pop %v21
  %v23 = vmul.f32 %v22, 0.6931472
  %v24 = vlaneseq
  %v25 = vshrl.u32 %v24, 7
  %v26 = vlaneseq
  %v27 = vand.u32 %v26, 127
  %s28 = smul.u32 0, 8
  %v29 = vstv %s28
  %v30 = vadd.s32 %v25, %v29
  %vm31 = vcmp.eq.s32.totalorder %v27, %v30
  %v32 = vsel %vm31, %v16, 0.0
  %v33 = vsel %vm12, %v32, 0.0
  %34 = vadd.xlane.f32.xlu0 %v33
  %v35 = vpop.xlane.xlu0 %34
  %v36 = vsub.f32 %v35, %v23
  %v37 = vld [vmem:[%s1] sm:$0xff]
  %v38 = vsub.f32 0.0, %v36
  %v39 = vmul.f32 %v38, %v37
  %vm40 = vcmask 7168
  %41 = vst.msk [vmem:[%s2] sm:$0xff] %vm40, %v39
  // Predicated region
  $region10: #{tpu_custom_call.1} parent=0 // pred_check
    _
  $region11: #{tpu_custom_call.1} parent=0 // pred_check_branch
    %43 = sbr.rel (0) target = $region13
  $region12: #{tpu_custom_call.1} parent=0 // pred_region
    _
  $region13: #{tpu_custom_call.1} parent=0 // pred_fallthru
    _
  // Predicated region
  $region14: #{tpu_custom_call.1} parent=0 // pred_check
    _
  $region15: #{tpu_custom_call.1} parent=0 // pred_check_branch
    %45 = sbr.rel (0) target = $region17
  $region16: #{tpu_custom_call.1} parent=0 // pred_region
    _
  $region17: #{tpu_custom_call.1} parent=0 // pred_fallthru
    _

</llo_original>
